<compile_context>
chip_gen: v7x
topology: tpu7x:2x2x1
jax: 0.10.0
libtpu: 0.0.40
codegen_flags: <defaults>
</compile_context>

<pallas_src>
import functools

import jax
import jax.numpy as jnp
from jax.experimental import pallas as pl
from jax.experimental.pallas import tpu as pltpu

ALPHA = 1.0
GAMMA = 2.0
LANES = 128
MAX_BLOCK_ROWS = 8192          # (8192, 128) f32 = 4 MiB per input per grid step
VMEM_LIMIT_BYTES = 48 << 20    # headroom for 16 MiB of double-buffered inputs


def _modulating_factor(one_minus_p, gamma):
    """(1 - p) ** gamma; small-integer gamma becomes a VALU multiply chain."""
    g = float(gamma)
    if g == 0.0:
        return jnp.ones_like(one_minus_p)
    if g == int(g) and 1 <= int(g) <= 4:
        mod = one_minus_p
        for _ in range(int(g) - 1):          # gamma=2 -> single square
            mod = mod * one_minus_p
        return mod
    return one_minus_p ** g                  # non-integer gamma: fall back to pow


def _focal_elementwise(x, t, *, alpha, gamma, approx_recip):
    """Per-element focal loss in stable logits form.

    Matches torch.sigmoid + F.binary_cross_entropy (incl. its -100 log clamp,
    reproduced here by clipping the logit to [-100, 100]).
    """
    x = x.astype(jnp.float32)
    t = t.astype(jnp.float32)
    xc = jnp.clip(x, -100.0, 100.0)          # PyTorch BCE -100 log-clamp parity
    e = jnp.exp(-jnp.abs(xc))                # exp(-|x|)            (EUP)
    log1p_e = jnp.log1p(e)                   # log(1 + exp(-|x|))   (EUP)
    # Stable logits-form BCE assembled in one expression:
    #   bce = max(x, 0) - t*x + log1p(exp(-|x|))
    bce = jnp.maximum(xc, 0.0) - t * xc + log1p_e
    # 1 - p = sigmoid(-x), reusing exp(-|x|); approx reciprocal stays on EUP.
    denom = 1.0 + e
    if approx_recip:
        inv = pl.reciprocal(denom, approx=True)
    else:
        inv = 1.0 / denom
    one_minus_p = jnp.where(xc > 0, e, 1.0) * inv
    out = _modulating_factor(one_minus_p, gamma) * bce
    if float(alpha) != 1.0:                  # statically skip alpha==1 multiply
        out = float(alpha) * out
    return out


def _focal_loss_kernel(pred_ref, target_ref, out_ref, *, alpha, gamma,
                       n_tail, needs_mask):
    fl = _focal_elementwise(pred_ref[...], target_ref[...],
                            alpha=alpha, gamma=gamma, approx_recip=True)

    def _write(vals):
        out_ref[...] = jnp.sum(vals, axis=0, keepdims=True)[None]

    if not needs_mask:
        # rows is an exact multiple of the block: no garbage anywhere.
        _write(fl)
        return

    i = pl.program_id(0)
    last = pl.num_programs(0) - 1

    @pl.when(i < last)
    def _():
        _write(fl)

    @pl.when(i == last)
    def _():
        # The partial last Pallas block is NOT zero-filled: mask garbage rows.
        rows, lanes = fl.shape
        row_ids = jax.lax.broadcasted_iota(jnp.int32, (rows, lanes), 0)
        col_ids = jax.lax.broadcasted_iota(jnp.int32, (rows, lanes), 1)
        in_block = row_ids * lanes + col_ids       # linear index within block
        _write(jnp.where(in_block < n_tail, fl, 0.0))


def focal_loss(pred, target, *, alpha=ALPHA, gamma=GAMMA, reduction="mean"):
    """Binary focal loss matching the PyTorch reference (sigmoid applied inside).

    `pred`/`target` may be any float/integer dtype (bf16 welcome); they are
    upcast to f32 per-tile inside the kernel — do not pre-cast to f32.
    """
    pred_flat = pred.reshape(-1)
    target_flat = target.reshape(-1)
    n = pred_flat.shape[0]

    n_main = (n // LANES) * LANES
    n_rem = n - n_main

    total = jnp.float32(0.0)

    if n_main > 0:
        # Ragged-lane n: run the kernel on the lane-aligned prefix and fold the
        # <128-element tail in with a tiny jnp reduction (no full-array pad).
        pred_main = pred_flat[:n_main] if n_rem else pred_flat
        target_main = target_flat[:n_main] if n_rem else target_flat

        rows = n_main // LANES
        pred2d = pred_main.reshape(rows, LANES)
        target2d = target_main.reshape(rows, LANES)

        # Full-extent block when everything fits in one step; otherwise 8192
        # rows (multiple of 8/16/32 -> valid for f32/bf16/int8 min tiles).
        block_rows = rows if rows <= MAX_BLOCK_ROWS else MAX_BLOCK_ROWS
        num_blocks = pl.cdiv(rows, block_rows)
        block_elems = block_rows * LANES
        n_tail = n_main - (num_blocks - 1) * block_elems   # valid elems in last block
        needs_mask = n_tail < block_elems

        kernel = functools.partial(
            _focal_loss_kernel, alpha=float(alpha), gamma=float(gamma),
            n_tail=int(n_tail), needs_mask=bool(needs_mask))

        bytes_per_elem = (jnp.dtype(pred.dtype).itemsize
                          + jnp.dtype(target.dtype).itemsize)
        cost = pl.CostEstimate(
            flops=15 * n_main,
            transcendentals=3 * n_main,
            bytes_accessed=bytes_per_elem * n_main + num_blocks * LANES * 4)

        partials = pl.pallas_call(
            kernel,
            out_shape=jax.ShapeDtypeStruct((num_blocks, 1, LANES), jnp.float32),
            grid_spec=pltpu.PrefetchScalarGridSpec(
                num_scalar_prefetch=0,
                grid=(num_blocks,),
                in_specs=[
                    pl.BlockSpec((block_rows, LANES), lambda i: (i, 0)),
                    pl.BlockSpec((block_rows, LANES), lambda i: (i, 0)),
                ],
                out_specs=pl.BlockSpec((1, 1, LANES), lambda i: (i, 0, 0)),
            ),
            compiler_params=pltpu.CompilerParams(
                dimension_semantics=("parallel",),
                vmem_limit_bytes=VMEM_LIMIT_BYTES),
            cost_estimate=cost,
        )(pred2d, target2d)

        total = total + jnp.sum(partials)

    if n_rem:
        # <128-element ragged tail: trivial, do it in plain jnp (exact divide).
        tail = _focal_elementwise(pred_flat[n_main:], target_flat[n_main:],
                                  alpha=alpha, gamma=gamma, approx_recip=False)
        total = total + jnp.sum(tail)

    if reduction == "mean":
        return total / jnp.float32(n)
    if reduction == "sum":
        return total
    # TODO(synk): reduction='none' (full per-element output) not implemented.
    raise NotImplementedError("reduction='none' not supported by this kernel")


def focal_loss_ref(pred, target, *, alpha=ALPHA, gamma=GAMMA):
    """Pure-JAX reference mirroring the PyTorch module (with BCE's -100 clamp)."""
    p = jax.nn.sigmoid(pred.reshape(-1).astype(jnp.float32))
    t = target.reshape(-1).astype(jnp.float32)
    log_p = jnp.maximum(jnp.log(p), -100.0)
    log_1mp = jnp.maximum(jnp.log(1.0 - p), -100.0)
    bce = -(t * log_p + (1.0 - t) * log_1mp)
    fl = alpha * ((1.0 - p) ** gamma) * bce
    return jnp.mean(fl)


if __name__ == "__main__":
    key = jax.random.PRNGKey(0)
    k1, k2 = jax.random.split(key)

    B, C, H, W = 2, 1, 16, 16
    pred = jax.random.normal(k1, (B, C, H, W), dtype=jnp.float32)
    target = jax.random.bernoulli(k2, 0.5, (B, C, H, W)).astype(jnp.float32)

    out = jax.block_until_ready(focal_loss(pred, target))
    ref = jax.block_until_ready(focal_loss_ref(pred, target))

    # rtol loosened slightly vs. v2 because the kernel uses the approx EUP
    # reciprocal (~1e-3-level relative error) for 1/(1+exp(-|x|)).
    assert jnp.allclose(out, ref, rtol=2e-3, atol=1e-6), (out, ref)
    print("KERNEL_OK")
</pallas_src>

<mosaic_0001>
module attributes {stable_mosaic.version = 11 : i64} {
  func.func @_focal_loss_kernel(%arg0: i32, %arg1: memref<4x128xf32, #tpu.memory_space<vmem>>, %arg2: memref<4x128xf32, #tpu.memory_space<vmem>>, %arg3: memref<1x1x128xf32, #tpu.memory_space<vmem>>) attributes {dimension_semantics = [#tpu.dimension_semantics<parallel>], iteration_bounds = array<i64: 1>, scalar_prefetch = 0 : i64, scratch_operands = 0 : i64, tpu.core_type = #tpu.core_type<tc>, window_params = [{transform_indices = @transform_0, window_bounds = array<i64: 4, 128>}, {transform_indices = @transform_1, window_bounds = array<i64: 4, 128>}, {transform_indices = @transform_2, window_bounds = array<i64: 1, 1, 128>}]} {
    %c0 = arith.constant 0 : index
    %c0_0 = arith.constant 0 : index
    %0 = vector.load %arg1[%c0, %c0_0] : memref<4x128xf32, #tpu.memory_space<vmem>>, vector<4x128xf32>
    %c0_1 = arith.constant 0 : index
    %c0_2 = arith.constant 0 : index
    %1 = vector.load %arg2[%c0_1, %c0_2] : memref<4x128xf32, #tpu.memory_space<vmem>>, vector<4x128xf32>
    %cst = arith.constant -1.000000e+02 : f32
    %cst_3 = arith.constant 1.000000e+02 : f32
    %2 = vector.broadcast %cst : f32 to vector<4x128xf32>
    %3 = arith.maximumf %2, %0 : vector<4x128xf32>
    %4 = vector.broadcast %cst_3 : f32 to vector<4x128xf32>
    %5 = arith.minimumf %4, %3 : vector<4x128xf32>
    %6 = math.absf %5 : vector<4x128xf32>
    %cst_4 = arith.constant 0.000000e+00 : f32
    %7 = vector.broadcast %cst_4 : f32 to vector<4x128xf32>
    %8 = arith.subf %7, %6 : vector<4x128xf32>
    %9 = math.exp %8 : vector<4x128xf32>
    %10 = math.log1p %9 : vector<4x128xf32>
    %cst_5 = arith.constant 0.000000e+00 : f32
    %11 = vector.broadcast %cst_5 : f32 to vector<4x128xf32>
    %12 = arith.maximumf %5, %11 : vector<4x128xf32>
    %13 = arith.mulf %1, %5 : vector<4x128xf32>
    %14 = arith.subf %12, %13 : vector<4x128xf32>
    %15 = arith.addf %14, %10 : vector<4x128xf32>
    %cst_6 = arith.constant 1.000000e+00 : f32
    %16 = vector.broadcast %cst_6 : f32 to vector<4x128xf32>
    %17 = arith.addf %16, %9 : vector<4x128xf32>
    %18 = tpu.reciprocal %17 {approx = true} : vector<4x128xf32> -> vector<4x128xf32>
    %cst_7 = arith.constant 0.000000e+00 : f32
    %19 = vector.broadcast %cst_7 : f32 to vector<4x128xf32>
    %20 = arith.cmpf ogt, %5, %19 : vector<4x128xf32>
    %cst_8 = arith.constant 1.000000e+00 : f32
    %21 = vector.broadcast %cst_8 : f32 to vector<4x128xf32>
    %22 = arith.select %20, %9, %21 : vector<4x128xi1>, vector<4x128xf32>
    %23 = arith.mulf %22, %18 : vector<4x128xf32>
    %24 = arith.mulf %23, %23 : vector<4x128xf32>
    %25 = arith.mulf %24, %15 : vector<4x128xf32>
    %cst_9 = arith.constant dense<0.000000e+00> : vector<128xf32>
    %26 = vector.multi_reduction <add>, %25, %cst_9 [0] : vector<4x128xf32> to vector<128xf32>
    %27 = vector.shape_cast %26 : vector<128xf32> to vector<1x128xf32>
    %28 = vector.shape_cast %27 : vector<1x128xf32> to vector<1x1x128xf32>
    %c0_10 = arith.constant 0 : index
    %c0_11 = arith.constant 0 : index
    %c0_12 = arith.constant 0 : index
    %29 = vector.load %arg3[%c0_10, %c0_11, %c0_12] : memref<1x1x128xf32, #tpu.memory_space<vmem>>, vector<1x1x128xf32>
    tpu.vector_store %arg3[%c0_10, %c0_11, %c0_12], %28 {strides = array<i32>} : memref<1x1x128xf32, #tpu.memory_space<vmem>>, vector<1x1x128xf32>,
    return
  }
  func.func @transform_0(%arg0: i32) -> (i32, i32) {
    %c0_i32 = arith.constant 0 : i32
    %c0_i32_0 = arith.constant 0 : i32
    return %arg0, %c0_i32 : i32, i32
  }
  func.func @transform_1(%arg0: i32) -> (i32, i32) {
    %c0_i32 = arith.constant 0 : i32
    %c0_i32_0 = arith.constant 0 : i32
    return %arg0, %c0_i32 : i32, i32
  }
  func.func @transform_2(%arg0: i32) -> (i32, i32, i32) {
    %c0_i32 = arith.constant 0 : i32
    %c0_i32_0 = arith.constant 0 : i32
    %c0_i32_1 = arith.constant 0 : i32
    return %arg0, %c0_i32, %c0_i32_0 : i32, i32, i32
  }
}

</mosaic_0001>

<llo_original>
// kernel: tpu_custom_call.1
$region0: #{tpu_custom_call.1}
  #allocation0 [shape = 'u32[]', space=smem, size = 0x4, offset = 0x4, fixed_abs, tag = 'smem constant byte address 0x4 - core index']
  #allocation1 [shape = 'u32[144,128]{1,0:T(1,128)}', space=vmem, size = 0x12000, scoped, tag = 'internal scratch']
  %s0 = inlined_call_operand.hbm [shape: f32[4,128], index: 0, kind: input, shape index: {}]
  %s1 = inlined_call_operand.hbm [shape: f32[4,128], index: 1, kind: input, shape index: {}]
  %s2 = inlined_call_operand.hbm [shape: f32[1,1,128], index: 2, kind: output, shape index: {}]
  %s3 = sld [smem:[#allocation0]]
  $region26: #{tpu_custom_call.1} parent=0
    _
  %s5 = ssub.s32 1, %s3
  %s6 = scalar_select 0, %s5, %s3
  $region1: #{tpu_custom_call.1} parent=0
    #allocation2 [shape = 'u8[2048]{0}', space=vmem, size = 0x800, scoped, tag = 'input window, operand 0, single buffered']
    #allocation3 [shape = 's32[1]{0}', space=sflag, size = 0x4, scoped, tag = 'scoped memory for tpu_custom_call.1']
    #allocation4 [shape = 's32[1]{0}', space=sflag, size = 0x4, scoped, tag = 'scoped memory for tpu_custom_call.1']
    #allocation5 [shape = 'u8[2048]{0}', space=vmem, size = 0x800, scoped, tag = 'input window, operand 1, single buffered']
    #allocation6 [shape = 's32[1]{0}', space=sflag, size = 0x4, scoped, tag = 'scoped memory for tpu_custom_call.1']
    #allocation7 [shape = 'u8[512]{0}', space=vmem, size = 0x400, scoped, tag = 'output window, operand 0, single buffered']
    %7 = vsyncpa [#allocation3], 0
    %8 = vsyncpa [#allocation6], 0
    %9 = vsyncpa [#allocation4], 0
    // Predicated region
    $region2: #{tpu_custom_call.1} parent=1 // pred_check
      _
    $region3: #{tpu_custom_call.1} parent=1 // pred_check_branch
      %11 = sbr.rel (0) target = $region5
    $region4: #{tpu_custom_call.1} parent=1 // pred_region
      %s13 = ssub.s32 64, 64
      %14 = vsyncadd [#allocation3], %s13
      %s16 = sshll.u32 [#allocation2], 4
      %s17 = int_to_ptr.vmem [resolvable:$true] %s16
      %19 = dma.hbm_to_vmem [thread:$0]  %s0, 64, %s17, [#allocation3]
    $region5: #{tpu_custom_call.1} parent=1 // pred_fallthru
      _
    // Predicated region
    $region6: #{tpu_custom_call.1} parent=1 // pred_check
      _
    $region7: #{tpu_custom_call.1} parent=1 // pred_check_branch
      %21 = sbr.rel (0) target = $region9
    $region8: #{tpu_custom_call.1} parent=1 // pred_region
      %s23 = ssub.s32 64, 64
      %24 = vsyncadd [#allocation6], %s23
      %s26 = sshll.u32 [#allocation5], 4
      %s27 = int_to_ptr.vmem [resolvable:$true] %s26
      %29 = dma.hbm_to_vmem [thread:$0]  %s1, 64, %s27, [#allocation6]
    $region9: #{tpu_custom_call.1} parent=1 // pred_fallthru
      _
    // Predicated region
    $region10: #{tpu_custom_call.1} parent=1 // pred_check
      _
    $region11: #{tpu_custom_call.1} parent=1 // pred_check_branch
      %31 = sbr.rel (0) target = $region13
    $region12: #{tpu_custom_call.1} parent=1 // pred_region
      %32 = dma.done [#allocation3], 64
    $region13: #{tpu_custom_call.1} parent=1 // pred_fallthru
      _
    // Predicated region
    $region14: #{tpu_custom_call.1} parent=1 // pred_check
      _
    $region15: #{tpu_custom_call.1} parent=1 // pred_check_branch
      %34 = sbr.rel (0) target = $region17
    $region16: #{tpu_custom_call.1} parent=1 // pred_region
      %35 = dma.done [#allocation6], 64
    $region17: #{tpu_custom_call.1} parent=1 // pred_fallthru
      _
    %v36 = vld [vmem:[#allocation2] sm:$0xf]
    %v37 = vld [vmem:[#allocation5] sm:$0xf]
    %v38 = vmax.f32 %v36, -100.0
    %v39 = vmin.f32 %v38, 100.0
    %v40 = vand.u32 2147483647, %v39
    %v41 = vsub.f32 0.0, %v40
    %v42 = vmul.f32 %v41, 1.442695
    %v43 = vpow.pop %v42
    %v44 = vadd.f32 %v43, 1.0
    %v45 = vlog2.pop %v44
    %v46 = vmul.f32 %v45, 0.6931472
    %v47 = vmul.f32 -0.5, %v43
    %v48 = vadd.f32 %v47, 1.0
    %v49 = vmul.f32 %v48, %v43
    %v50 = vand.u32 2147483647, %v43
    %vm51 = vcmp.lt.f32.partialorder %v50, 0.0004427343
    %v52 = vsel %vm51, %v49, %v46
    %v53 = vmax.f32 %v39, 0.0
    %v54 = vmul.f32 %v37, %v39
    %v55 = vsub.f32 %v53, %v54
    %v56 = vadd.f32 %v55, %v52
    %v57 = vadd.f32 %v43, 1.0
    %v58 = vrcp.pop %v57
    %vm59 = vcmp.gt.f32.partialorder %v39, 0.0
    %v60 = vsel %vm59, %v43, 1.0
    %v61 = vmul.f32 %v60, %v58
    %v62 = vmul.f32 %v61, %v61
    %v63 = vmul.f32 %v62, %v56
    %vm64 = vcmask 1043456
    %v65 = vsel %vm64, %v63, 0.0
    %v66 = vrot.slane %v65, 4
    %v67 = vadd.f32 %v65, %v66
    %v68 = vrot.slane %v67, 2
    %v69 = vadd.f32 %v67, %v68
    %v70 = vrot.slane %v69, 1
    %v71 = vadd.f32 %v69, %v70
    %72 = vst [vmem:[#allocation7] sm:$0x1] %v71
    // Predicated region
    $region18: #{tpu_custom_call.1} parent=1 // pred_check
      _
    $region19: #{tpu_custom_call.1} parent=1 // pred_check_branch
      %74 = sbr.rel (0) target = $region21
    $region20: #{tpu_custom_call.1} parent=1 // pred_region
      %s76 = ssub.s32 16, 16
      %77 = vsyncadd [#allocation4], %s76
      %s79 = sshll.u32 [#allocation7], 4
      %s80 = int_to_ptr.vmem [resolvable:$true] %s79
      %82 = dma.vmem_to_hbm [thread:$0]  %s80, 16, %s2, [#allocation4]
    $region21: #{tpu_custom_call.1} parent=1 // pred_fallthru
      _
    // Predicated region
    $region22: #{tpu_custom_call.1} parent=1 // pred_check
      _
    $region23: #{tpu_custom_call.1} parent=1 // pred_check_branch
      %84 = sbr.rel (0) target = $region25
    $region24: #{tpu_custom_call.1} parent=1 // pred_region
      %85 = dma.done [#allocation4], 16
    $region25: #{tpu_custom_call.1} parent=1 // pred_fallthru
      _
    %86 = vsyncpa [#allocation3], 1
    %87 = vsyncpa [#allocation6], 1
    %88 = vsyncpa [#allocation4], 1

</llo_original>
